<compile_context>
chip_gen: v7x
topology: tpu7x:2x2x1
jax: 0.10.0
libtpu: 0.0.40
codegen_flags: <defaults>
</compile_context>

<pallas_src>
import functools

import jax
import jax.numpy as jnp
import numpy as np
from jax import lax
from jax.experimental import pallas as pl
from jax.experimental.pallas import tpu as pltpu

_LANES = 128


def _round_up(x, m):
    return (x + m - 1) // m * m


# --------------------------------------------------------------------------- params
def init_params(key, input_feature_len, hidden_size):
    """Deterministic synthetic parameters, packed layout (same init range as torch)."""
    F, H = input_feature_len, hidden_size
    bound = 1.0 / float(np.sqrt(H))
    keys = jax.random.split(key, 6)
    u = lambda k, shape: jax.random.uniform(k, shape, jnp.float32, -bound, bound)
    return {
        "w_i": u(keys[0], (F, 3 * H)),     # [W_ir | W_iz | W_in], pre-transposed
        "w_h": u(keys[1], (H, 3 * H)),     # [W_hr | W_hz | W_hn], pre-transposed
        "b_i": u(keys[2], (1, 3 * H)),     # [b_ir | b_iz | b_in]
        "b_h": u(keys[3], (1, 3 * H)),     # [b_hr | b_hz | b_hn]
        "w_out": u(keys[4], (1, H)),       # Linear(H,1) weight as a row
        "b_out": u(keys[5], (1,)),         # Linear(H,1) bias (scalar, goes to SMEM)
    }


def _pad_params(params, H, Hp, matmul_dtype):
    """Zero-pad packed params so each gate occupies a 128-aligned lane range."""
    def pad_gates(a):                       # (..., 3H) -> (..., 3Hp), gate-aligned
        parts = []
        for g in range(3):
            p = a[..., g * H:(g + 1) * H]
            parts.append(jnp.pad(p, [(0, 0)] * (p.ndim - 1) + [(0, Hp - H)]))
        return jnp.concatenate(parts, axis=-1)

    w_i = pad_gates(params["w_i"])                                    # (F, 3Hp)
    w_h = jnp.pad(pad_gates(params["w_h"]), ((0, Hp - H), (0, 0)))    # (Hp, 3Hp)
    if matmul_dtype != jnp.float32:
        w_i = w_i.astype(matmul_dtype)
        w_h = w_h.astype(matmul_dtype)
    return {
        "w_i": w_i,
        "w_h": w_h,
        "b_i": pad_gates(params["b_i"]),                              # (1, 3Hp)
        "b_h": pad_gates(params["b_h"]),                              # (1, 3Hp)
        "w_out": jnp.pad(params["w_out"], ((0, 0), (0, Hp - H))),     # (1, Hp)
        "b_out": params["b_out"],                                     # (1,)
    }


def _dropout_mask(rng_key, p, shape):
    """Inverted-dropout mask: values are 0 or 1/(1-p)."""
    if p <= 0.0:
        return jnp.ones(shape, jnp.float32)
    if p >= 1.0:           # guard the 1/(1-p) divide
        return jnp.zeros(shape, jnp.float32)
    keep = jax.random.bernoulli(rng_key, 1.0 - p, shape)
    return keep.astype(jnp.float32) * (1.0 / (1.0 - p))


# --------------------------------------------------------------------------- GRU math
def _gru_step(y, h, w_i, w_h, b_i, b_h, hp, matmul_dtype):
    """PyTorch GRUCell update on gate-aligned packed weights (f32 accum & gate math)."""
    gi = jnp.dot(y.astype(matmul_dtype), w_i, preferred_element_type=jnp.float32) + b_i
    gh = jnp.dot(h.astype(matmul_dtype), w_h, preferred_element_type=jnp.float32) + b_h
    r = jax.nn.sigmoid(gi[:, 0 * hp:1 * hp] + gh[:, 0 * hp:1 * hp])
    z = jax.nn.sigmoid(gi[:, 1 * hp:2 * hp] + gh[:, 1 * hp:2 * hp])
    n = jnp.tanh(gi[:, 2 * hp:3 * hp] + r * gh[:, 2 * hp:3 * hp])
    return (1.0 - z) * n + z * h


# --------------------------------------------------------------------------- single step
def _decoder_cell_kernel(*refs, hidden_pad, training, matmul_dtype):
    if training:
        (y_ref, h_ref, wi_ref, wh_ref, bi_ref, bh_ref, wout_ref, bout_ref,
         mask_ref, out_ref, hout_ref) = refs
    else:
        (y_ref, h_ref, wi_ref, wh_ref, bi_ref, bh_ref, wout_ref, bout_ref,
         out_ref, hout_ref) = refs

    h_new = _gru_step(y_ref[...], h_ref[...],
                      wi_ref[...].astype(matmul_dtype), wh_ref[...].astype(matmul_dtype),
                      bi_ref[...], bh_ref[...], hidden_pad, matmul_dtype)

    # output = self.out(rnn_hidden): VPU multiply + lane reduce on the UN-dropped hidden.
    out_col = jnp.sum(h_new * wout_ref[...], axis=-1, keepdims=True) + bout_ref[0]
    out_ref[...] = jnp.broadcast_to(out_col, out_ref.shape)     # lane-dense slab

    if training:
        hout_ref[...] = h_new * mask_ref[...]
    else:
        hout_ref[...] = h_new


def decoder_cell_forward(prev_hidden, y, params, *, training=False, dropout_p=0.2,
                         rng_key=None, dropout_mask=None, matmul_dtype=jnp.float32):
    """One DecoderCell.forward(prev_hidden, y) -> (output (B,1), hidden (B,H)).

    For autoregressive decoding use decoder_cell_rollout (fuses all steps into one
    pallas_call so the weights are DMA'd once instead of once per step).
    """
    B, H = prev_hidden.shape
    Hp = _round_up(H, _LANES)
    p = _pad_params(params, H, Hp, matmul_dtype)
    h_pad = jnp.pad(prev_hidden, ((0, 0), (0, Hp - H)))
    y_in = y if matmul_dtype == jnp.float32 else y.astype(matmul_dtype)

    vmem = pl.BlockSpec(memory_space=pltpu.MemorySpace.VMEM)
    smem = pl.BlockSpec(memory_space=pltpu.MemorySpace.SMEM)
    inputs = [y_in, h_pad, p["w_i"], p["w_h"], p["b_i"], p["b_h"], p["w_out"], p["b_out"]]
    in_specs = [vmem] * 7 + [smem]
    if training:
        if dropout_mask is None:
            assert rng_key is not None, "training=True needs rng_key or dropout_mask"
            mask = _dropout_mask(rng_key, dropout_p, (B, Hp))
        else:
            mask = jnp.pad(dropout_mask.astype(jnp.float32), ((0, 0), (0, Hp - H)))
        inputs.append(mask)
        in_specs.append(vmem)

    kernel = functools.partial(_decoder_cell_kernel, hidden_pad=Hp,
                               training=training, matmul_dtype=matmul_dtype)
    out_pad, hidden_pad_out = pl.pallas_call(
        kernel,
        out_shape=(jax.ShapeDtypeStruct((B, _LANES), jnp.float32),
                   jax.ShapeDtypeStruct((B, Hp), jnp.float32)),
        in_specs=in_specs,
        out_specs=(vmem, vmem),
        compiler_params=pltpu.CompilerParams(vmem_limit_bytes=64 * 1024 * 1024),
    )(*inputs)
    return out_pad[:, :1], hidden_pad_out[:, :H]


# --------------------------------------------------------------------------- fused rollout
def _decoder_rollout_kernel(*refs, hidden_pad, chunk, training, matmul_dtype):
    if training:
        (y_ref, h0_ref, wi_ref, wh_ref, bi_ref, bh_ref, wout_ref, bout_ref,
         mask_ref, out_ref, hseq_ref, h_carry) = refs
    else:
        (y_ref, h0_ref, wi_ref, wh_ref, bi_ref, bh_ref, wout_ref, bout_ref,
         out_ref, hseq_ref, h_carry) = refs

    c = pl.program_id(1)            # time-chunk index (sequential / "arbitrary")

    @pl.when(c == 0)                # new batch tile -> (re)load the initial hidden
    def _():
        h_carry[...] = h0_ref[...]

    bt = h_carry.shape[0]
    hp3 = 3 * hidden_pad

    # Hoist weight/bias loads and broadcasts out of the unrolled time loop.
    w_i = wi_ref[...].astype(matmul_dtype)
    w_h = wh_ref[...].astype(matmul_dtype)
    b_i = jnp.broadcast_to(bi_ref[...], (bt, hp3))
    b_h = jnp.broadcast_to(bh_ref[...], (bt, hp3))
    w_out = jnp.broadcast_to(wout_ref[...], (bt, hidden_pad))
    b_out = bout_ref[0]
    lane_ids = lax.broadcasted_iota(jnp.int32, (bt, chunk), 1)

    def step(j, carry):
        h, head_acc = carry
        h_new = _gru_step(y_ref[j], h, w_i, w_h, b_i, b_h, hidden_pad, matmul_dtype)
        # Linear(H,1) head on the UN-dropped hidden: VPU mul + XLU lane reduce,
        # deposited into lane j of the (bt, chunk) head tile.
        head_col = jnp.sum(h_new * w_out, axis=-1, keepdims=True) + b_out
        head_acc = jnp.where(lane_ids == j, head_col, head_acc)
        if training:
            h_fb = h_new * mask_ref[j]
        else:
            h_fb = h_new
        hseq_ref[j] = h_fb           # lane-dense (bt, Hp) store
        return h_fb, head_acc

    h_last, head_acc = lax.fori_loop(
        0, chunk, step, (h_carry[...], jnp.zeros((bt, chunk), jnp.float32)),
        unroll=True)

    h_carry[...] = h_last            # the (dropout-ed) hidden is what gets fed back
    out_ref[0] = head_acc            # one head-tile write per chunk


def decoder_cell_rollout(init_hidden, ys, params, *, training=False, dropout_p=0.2,
                         rng_key=None, dropout_mask=None, matmul_dtype=jnp.float32,
                         time_chunk=16, batch_tile=None):
    """T chained DecoderCell steps fused into ONE pallas_call.

    grid = (batch_tiles, ceil(T/CHUNK)); each grid step runs CHUNK timesteps in an
    unrolled in-kernel loop. Weights stay VMEM-resident (constant index_maps); the
    hidden state is carried across chunks in a VMEM scratch. Returns
    (outputs (T,B,1), hiddens (T,B,H)); the hiddens are the dropout-ed hiddens, which
    are also what is fed back step-to-step (same as chaining DecoderCell.forward).
    """
    T, B, F = ys.shape
    H = init_hidden.shape[1]
    Hp = _round_up(H, _LANES)
    chunk = max(1, min(int(time_chunk), T))
    nc = (T + chunk - 1) // chunk
    Tpad = nc * chunk
    bt = B if batch_tile is None else int(batch_tile)
    assert B % bt == 0 and (bt == B or bt % 8 == 0), "batch_tile must tile B (mult. of 8)"
    nb = B // bt

    p = _pad_params(params, H, Hp, matmul_dtype)
    h0 = jnp.pad(init_hidden, ((0, 0), (0, Hp - H)))
    ys_p = ys if matmul_dtype == jnp.float32 else ys.astype(matmul_dtype)
    if Tpad != T:
        ys_p = jnp.pad(ys_p, ((0, Tpad - T), (0, 0), (0, 0)))

    const = lambda shape: pl.BlockSpec(shape, lambda b, c: (0, 0))
    in_specs = [
        pl.BlockSpec((chunk, bt, F), lambda b, c: (c, b, 0)),        # y[t] stream
        pl.BlockSpec((bt, Hp), lambda b, c: (b, 0)),                 # initial hidden
        const((F, 3 * Hp)), const((Hp, 3 * Hp)),                     # packed W_i, W_h
        const((1, 3 * Hp)), const((1, 3 * Hp)),                      # packed b_i, b_h
        const((1, Hp)),                                              # w_out row
        pl.BlockSpec(memory_space=pltpu.MemorySpace.SMEM),           # b_out scalar
    ]
    inputs = [ys_p, h0, p["w_i"], p["w_h"], p["b_i"], p["b_h"], p["w_out"], p["b_out"]]
    if training:
        if dropout_mask is None:
            assert rng_key is not None, "training=True needs rng_key or dropout_mask"
            mask = _dropout_mask(rng_key, dropout_p, (Tpad, B, Hp))
        else:
            mask = jnp.pad(dropout_mask.astype(jnp.float32),
                           ((0, Tpad - T), (0, 0), (0, Hp - H)))
        inputs.append(mask)
        in_specs.append(pl.BlockSpec((chunk, bt, Hp), lambda b, c: (c, b, 0)))

    kernel = functools.partial(_decoder_rollout_kernel, hidden_pad=Hp, chunk=chunk,
                               training=training, matmul_dtype=matmul_dtype)
    # NOTE(v7x): pass batch_tile (multiple of 8) when B >= 16 so the "parallel" batch
    # axis spreads over both TensorCores; for large H also pass matmul_dtype=bfloat16
    # to halve the VMEM-resident weight footprint (stay inside 64 MiB VMEM).
    out_tiles, hseq_pad = pl.pallas_call(
        kernel,
        out_shape=(jax.ShapeDtypeStruct((nc, B, chunk), jnp.float32),
                   jax.ShapeDtypeStruct((Tpad, B, Hp), jnp.float32)),
        grid_spec=pltpu.PrefetchScalarGridSpec(
            num_scalar_prefetch=0,
            grid=(nb, nc),
            in_specs=in_specs,
            out_specs=(pl.BlockSpec((1, bt, chunk), lambda b, c: (c, b, 0)),
                       pl.BlockSpec((chunk, bt, Hp), lambda b, c: (c, b, 0))),
            scratch_shapes=[pltpu.VMEM((bt, Hp), jnp.float32)]),
        compiler_params=pltpu.CompilerParams(
            dimension_semantics=("parallel", "arbitrary"),
            vmem_limit_bytes=64 * 1024 * 1024),
    )(*inputs)

    outs = jnp.transpose(out_tiles, (0, 2, 1)).reshape(Tpad, B)[:T, :, None]   # (T,B,1)
    hseq = hseq_pad[:T, :, :H]                                                 # (T,B,H)
    return outs, hseq


# --------------------------------------------------------------------------- reference
def decoder_cell_reference(prev_hidden, y, params):
    """Pure-JAX reference of one DecoderCell step (eval mode)."""
    H = prev_hidden.shape[1]
    hi = jax.lax.Precision.HIGHEST
    gi = jnp.dot(y, params["w_i"], precision=hi) + params["b_i"]
    gh = jnp.dot(prev_hidden, params["w_h"], precision=hi) + params["b_h"]
    r = jax.nn.sigmoid(gi[:, :H] + gh[:, :H])
    z = jax.nn.sigmoid(gi[:, H:2 * H] + gh[:, H:2 * H])
    n = jnp.tanh(gi[:, 2 * H:] + r * gh[:, 2 * H:])
    h_new = (1.0 - z) * n + z * prev_hidden
    out = jnp.sum(h_new * params["w_out"], axis=-1, keepdims=True) + params["b_out"]
    return out, h_new


# --------------------------------------------------------------------------- demo / checks
if __name__ == "__main__":
    B, F, H, T = 8, 8, 32, 40   # batch, input_feature_len, hidden_size, decode steps

    key = jax.random.PRNGKey(0)
    k_params, k_h, k_y, k_seq, k_d1, k_d2 = jax.random.split(key, 6)
    params = init_params(k_params, F, H)
    prev_hidden = jax.random.normal(k_h, (B, H), dtype=jnp.float32)
    y = jax.random.normal(k_y, (B, F), dtype=jnp.float32)
    ys = jax.random.normal(k_seq, (T, B, F), dtype=jnp.float32)

    # --- single step, eval mode -------------------------------------------------
    out, hidden = decoder_cell_forward(prev_hidden, y, params, training=False)
    jax.block_until_ready((out, hidden))
    out_ref, h_ref = decoder_cell_reference(prev_hidden, y, params)
    np.testing.assert_allclose(np.asarray(out), np.asarray(out_ref), rtol=1e-5, atol=1e-5)
    np.testing.assert_allclose(np.asarray(hidden), np.asarray(h_ref), rtol=1e-5, atol=1e-5)

    # --- single step, train mode (explicit host-generated dropout mask) ----------
    mask1 = _dropout_mask(k_d1, 0.2, (B, H))
    out_t, hidden_t = decoder_cell_forward(prev_hidden, y, params, training=True,
                                           dropout_p=0.2, dropout_mask=mask1)
    jax.block_until_ready((out_t, hidden_t))
    np.testing.assert_allclose(np.asarray(out_t), np.asarray(out_ref), rtol=1e-5, atol=1e-5)
    np.testing.assert_allclose(np.asarray(hidden_t), np.asarray(h_ref * mask1),
                               rtol=1e-5, atol=1e-5)

    # --- fused chunked rollout (eval) vs. Python loop of the reference -----------
    outs_k, hseq_k = decoder_cell_rollout(prev_hidden, ys, params, training=False,
                                          time_chunk=16)
    jax.block_until_ready((outs_k, hseq_k))
    h = prev_hidden
    for t in range(T):
        o_t, h = decoder_cell_reference(h, ys[t], params)
        np.testing.assert_allclose(np.asarray(outs_k[t]), np.asarray(o_t),
                                   rtol=1e-4, atol=1e-4)
        np.testing.assert_allclose(np.asarray(hseq_k[t]), np.asarray(h),
                                   rtol=1e-4, atol=1e-4)

    # --- fused rollout, train mode (explicit mask, checked against a ref loop) ---
    mask_seq = _dropout_mask(k_d2, 0.2, (T, B, H))
    outs_tr, hseq_tr = decoder_cell_rollout(prev_hidden, ys, params, training=True,
                                            dropout_p=0.2, dropout_mask=mask_seq,
                                            time_chunk=16)
    jax.block_until_ready((outs_tr, hseq_tr))
    h = prev_hidden
    for t in range(T):
        o_t, h_new = decoder_cell_reference(h, ys[t], params)
        h = h_new * mask_seq[t]          # dropped hidden is returned AND fed back
        np.testing.assert_allclose(np.asarray(outs_tr[t]), np.asarray(o_t),
                                   rtol=1e-4, atol=1e-4)
        np.testing.assert_allclose(np.asarray(hseq_tr[t]), np.asarray(h),
                                   rtol=1e-4, atol=1e-4)

    print("KERNEL_OK")
</pallas_src>

<mosaic_0001>
module attributes {stable_mosaic.version = 11 : i64} {
  func.func @_decoder_cell_kernel(%arg0: memref<8x8xf32, #tpu.memory_space<vmem>>, %arg1: memref<8x128xf32, #tpu.memory_space<vmem>>, %arg2: memref<8x384xf32, #tpu.memory_space<vmem>>, %arg3: memref<128x384xf32, #tpu.memory_space<vmem>>, %arg4: memref<1x384xf32, #tpu.memory_space<vmem>>, %arg5: memref<1x384xf32, #tpu.memory_space<vmem>>, %arg6: memref<1x128xf32, #tpu.memory_space<vmem>>, %arg7: memref<1xf32, #tpu.memory_space<smem>>, %arg8: memref<8x128xf32, #tpu.memory_space<vmem>>, %arg9: memref<8x128xf32, #tpu.memory_space<vmem>>) attributes {dimension_semantics = [], scalar_prefetch = 0 : i64, scratch_operands = 0 : i64, tpu.core_type = #tpu.core_type<tc>} {
    %c0 = arith.constant 0 : index
    %c0_0 = arith.constant 0 : index
    %0 = vector.load %arg0[%c0, %c0_0] : memref<8x8xf32, #tpu.memory_space<vmem>>, vector<8x8xf32>
    %c0_1 = arith.constant 0 : index
    %c0_2 = arith.constant 0 : index
    %1 = vector.load %arg1[%c0_1, %c0_2] : memref<8x128xf32, #tpu.memory_space<vmem>>, vector<8x128xf32>
    %c0_3 = arith.constant 0 : index
    %c0_4 = arith.constant 0 : index
    %2 = vector.load %arg2[%c0_3, %c0_4] : memref<8x384xf32, #tpu.memory_space<vmem>>, vector<8x384xf32>
    %c0_5 = arith.constant 0 : index
    %c0_6 = arith.constant 0 : index
    %3 = vector.load %arg3[%c0_5, %c0_6] : memref<128x384xf32, #tpu.memory_space<vmem>>, vector<128x384xf32>
    %c0_7 = arith.constant 0 : index
    %c0_8 = arith.constant 0 : index
    %4 = vector.load %arg4[%c0_7, %c0_8] : memref<1x384xf32, #tpu.memory_space<vmem>>, vector<1x384xf32>
    %c0_9 = arith.constant 0 : index
    %c0_10 = arith.constant 0 : index
    %5 = vector.load %arg5[%c0_9, %c0_10] : memref<1x384xf32, #tpu.memory_space<vmem>>, vector<1x384xf32>
    %cst = arith.constant dense<0.000000e+00> : vector<8x384xf32>
    %6 = tpu.matmul %0, %2, %cst {dimension_numbers = #tpu.dot_dimension_numbers<[1], [0], [0], [1], [0, 0, 1, 1], [], []>} : vector<8x8xf32>, vector<8x384xf32>, vector<8x384xf32> -> vector<8x384xf32>
    %7 = vector.broadcast %4 : vector<1x384xf32> to vector<8x384xf32>
    %8 = arith.addf %6, %7 : vector<8x384xf32>
    %cst_11 = arith.constant dense<0.000000e+00> : vector<8x384xf32>
    %9 = tpu.matmul %1, %3, %cst_11 {dimension_numbers = #tpu.dot_dimension_numbers<[1], [0], [0], [1], [0, 0, 1, 1], [], []>} : vector<8x128xf32>, vector<128x384xf32>, vector<8x384xf32> -> vector<8x384xf32>
    %10 = vector.broadcast %5 : vector<1x384xf32> to vector<8x384xf32>
    %11 = arith.addf %9, %10 : vector<8x384xf32>
    %12 = vector.extract_strided_slice %8 {offsets = [0, 0], sizes = [8, 128], strides = [1, 1]} : vector<8x384xf32> to vector<8x128xf32>
    %13 = vector.extract_strided_slice %11 {offsets = [0, 0], sizes = [8, 128], strides = [1, 1]} : vector<8x384xf32> to vector<8x128xf32>
    %14 = arith.addf %12, %13 : vector<8x128xf32>
    %15 = arith.negf %14 : vector<8x128xf32>
    %16 = math.exp %15 : vector<8x128xf32>
    %cst_12 = arith.constant 1.000000e+00 : f32
    %17 = vector.broadcast %cst_12 : f32 to vector<8x128xf32>
    %18 = arith.addf %17, %16 : vector<8x128xf32>
    %19 = arith.divf %17, %18 : vector<8x128xf32>
    %20 = vector.extract_strided_slice %8 {offsets = [0, 128], sizes = [8, 128], strides = [1, 1]} : vector<8x384xf32> to vector<8x128xf32>
    %21 = vector.extract_strided_slice %11 {offsets = [0, 128], sizes = [8, 128], strides = [1, 1]} : vector<8x384xf32> to vector<8x128xf32>
    %22 = arith.addf %20, %21 : vector<8x128xf32>
    %23 = arith.negf %22 : vector<8x128xf32>
    %24 = math.exp %23 : vector<8x128xf32>
    %cst_13 = arith.constant 1.000000e+00 : f32
    %25 = vector.broadcast %cst_13 : f32 to vector<8x128xf32>
    %26 = arith.addf %25, %24 : vector<8x128xf32>
    %27 = arith.divf %25, %26 : vector<8x128xf32>
    %28 = vector.extract_strided_slice %8 {offsets = [0, 256], sizes = [8, 128], strides = [1, 1]} : vector<8x384xf32> to vector<8x128xf32>
    %29 = vector.extract_strided_slice %11 {offsets = [0, 256], sizes = [8, 128], strides = [1, 1]} : vector<8x384xf32> to vector<8x128xf32>
    %30 = arith.mulf %19, %29 : vector<8x128xf32>
    %31 = arith.addf %28, %30 : vector<8x128xf32>
    %32 = math.tanh %31 : vector<8x128xf32>
    %cst_14 = arith.constant 1.000000e+00 : f32
    %33 = vector.broadcast %cst_14 : f32 to vector<8x128xf32>
    %34 = arith.subf %33, %27 : vector<8x128xf32>
    %35 = arith.mulf %34, %32 : vector<8x128xf32>
    %36 = arith.mulf %27, %1 : vector<8x128xf32>
    %37 = arith.addf %35, %36 : vector<8x128xf32>
    %c0_15 = arith.constant 0 : index
    %c0_16 = arith.constant 0 : index
    %38 = vector.load %arg6[%c0_15, %c0_16] : memref<1x128xf32, #tpu.memory_space<vmem>>, vector<1x128xf32>
    %39 = vector.broadcast %38 : vector<1x128xf32> to vector<8x128xf32>
    %40 = arith.mulf %37, %39 : vector<8x128xf32>
    %cst_17 = arith.constant dense<0.000000e+00> : vector<8xf32>
    %41 = vector.multi_reduction <add>, %40, %cst_17 [1] : vector<8x128xf32> to vector<8xf32>
    %42 = vector.shape_cast %41 : vector<8xf32> to vector<8x1xf32>
    %c0_18 = arith.constant 0 : index
    %43 = memref.load %arg7[%c0_18] : memref<1xf32, #tpu.memory_space<smem>>
    %44 = vector.broadcast %43 : f32 to vector<8x1xf32>
    %45 = arith.addf %42, %44 : vector<8x1xf32>
    %46 = vector.shape_cast %45 : vector<8x1xf32> to vector<8x1xf32>
    %47 = vector.broadcast %46 : vector<8x1xf32> to vector<8x128xf32>
    %c0_19 = arith.constant 0 : index
    %c0_20 = arith.constant 0 : index
    %48 = vector.load %arg8[%c0_19, %c0_20] : memref<8x128xf32, #tpu.memory_space<vmem>>, vector<8x128xf32>
    tpu.vector_store %arg8[%c0_19, %c0_20], %47 {strides = array<i32>} : memref<8x128xf32, #tpu.memory_space<vmem>>, vector<8x128xf32>,
    %c0_21 = arith.constant 0 : index
    %c0_22 = arith.constant 0 : index
    %49 = vector.load %arg9[%c0_21, %c0_22] : memref<8x128xf32, #tpu.memory_space<vmem>>, vector<8x128xf32>
    tpu.vector_store %arg9[%c0_21, %c0_22], %37 {strides = array<i32>} : memref<8x128xf32, #tpu.memory_space<vmem>>, vector<8x128xf32>,
    return
  }
}

</mosaic_0001>

<llo_original>
// kernel: tpu_custom_call.1
$region0: #{tpu_custom_call.1}
  #allocation0 [shape = 'u32[]', space=smem, size = 0x4, offset = 0x4, fixed_abs, tag = 'smem constant byte address 0x4 - core index']
  #allocation1 [shape = 'u32[144,128]{1,0:T(1,128)}', space=vmem, size = 0x12000, scoped, tag = 'internal scratch']
  #allocation2 [shape = 'f32[1]{0:T(128)S(6)}', space=smem, size = 0x200, scoped, tag = 'scoped memory for tpu_custom_call.1']
  %s0 = inlined_call_operand.hbm [shape: f32[8,8], index: 0, kind: input, shape index: {}]
  %s1 = inlined_call_operand.hbm [shape: f32[8,128], index: 1, kind: input, shape index: {}]
  %s2 = inlined_call_operand.hbm [shape: f32[8,384], index: 2, kind: input, shape index: {}]
  %s3 = inlined_call_operand.hbm [shape: f32[128,384], index: 3, kind: input, shape index: {}]
  %s4 = inlined_call_operand.hbm [shape: f32[1,384], index: 4, kind: input, shape index: {}]
  %s5 = inlined_call_operand.hbm [shape: f32[1,384], index: 5, kind: input, shape index: {}]
  %s6 = inlined_call_operand.hbm [shape: f32[1,128], index: 6, kind: input, shape index: {}]
  %s7 = inlined_call_operand.<no memory space> [shape: f32[1], index: 7, kind: input, shape index: {}]
  %s8 = inlined_call_operand.hbm [shape: f32[8,128], index: 8, kind: output, shape index: {0}]
  %s9 = inlined_call_operand.hbm [shape: f32[8,128], index: 9, kind: output, shape index: {1}]
  %10 = xla_tuple %s8, %s9
  %s11 = sld [smem:[#allocation0]]
  $region78: #{tpu_custom_call.1} parent=0
    _
  %s13 = ssub.s32 1, %s11
  %s14 = scalar_select 0, %s13, %s11
  %15 = sst [smem:[#allocation2]] %s7
  $region1: #{tpu_custom_call.1} parent=0
    #allocation3 [shape = 'u8[4096]{0}', space=vmem, size = 0x1000, scoped, tag = 'input window, operand 0, single buffered']
    #allocation4 [shape = 's32[1]{0}', space=sflag, size = 0x4, scoped, tag = 'scoped memory for tpu_custom_call.1']
    #allocation5 [shape = 's32[1]{0}', space=sflag, size = 0x4, scoped, tag = 'scoped memory for tpu_custom_call.1']
    #allocation6 [shape = 'u8[4096]{0}', space=vmem, size = 0x1000, scoped, tag = 'input window, operand 1, single buffered']
    #allocation7 [shape = 's32[1]{0}', space=sflag, size = 0x4, scoped, tag = 'scoped memory for tpu_custom_call.1']
    #allocation8 [shape = 'u8[12288]{0}', space=vmem, size = 0x3000, scoped, tag = 'input window, operand 2, single buffered']
    #allocation9 [shape = 'u8[196608]{0}', space=vmem, size = 0x30000, scoped, tag = 'input window, operand 3, single buffered']
    #allocation10 [shape = 's32[1]{0}', space=sflag, size = 0x4, scoped, tag = 'scoped memory for tpu_custom_call.1']
    #allocation11 [shape = 'u8[1536]{0}', space=vmem, size = 0x800, scoped, tag = 'input window, operand 4, single buffered']
    #allocation12 [shape = 'u8[1536]{0}', space=vmem, size = 0x800, scoped, tag = 'input window, operand 5, single buffered']
    #allocation13 [shape = 's32[1]{0}', space=sflag, size = 0x4, scoped, tag = 'scoped memory for tpu_custom_call.1']
    #allocation14 [shape = 'u8[512]{0}', space=vmem, size = 0x400, scoped, tag = 'input window, operand 6, single buffered']
    #allocation15 [shape = 'u8[4096]{0}', space=vmem, size = 0x1000, scoped, tag = 'output window, operand 0, single buffered']
    #allocation16 [shape = 'u8[4096]{0}', space=vmem, size = 0x1000, scoped, tag = 'output window, operand 1, single buffered']
    #allocation17 [shape = 's32[1]{0}', space=sflag, size = 0x4, scoped, tag = 'scoped memory for tpu_custom_call.1']
    %16 = vsyncpa [#allocation4], 0
    %17 = vsyncpa [#allocation7], 0
    %18 = vsyncpa [#allocation10], 0
    %19 = vsyncpa [#allocation13], 0
    %20 = vsyncpa [#allocation5], 0
    %21 = vsyncpa [#allocation17], 0
    // Predicated region
    $region2: #{tpu_custom_call.1} parent=1 // pred_check
      _
    $region3: #{tpu_custom_call.1} parent=1 // pred_check_branch
      %23 = sbr.rel (0) target = $region5
    $region4: #{tpu_custom_call.1} parent=1 // pred_region
      %s25 = ssub.s32 128, 128
      %26 = vsyncadd [#allocation4], %s25
      %s28 = sshll.u32 [#allocation3], 4
      %s29 = int_to_ptr.vmem [resolvable:$true] %s28
      %31 = dma.hbm_to_vmem [thread:$0]  %s0, 128, %s29, [#allocation4]
    $region5: #{tpu_custom_call.1} parent=1 // pred_fallthru
      _
    // Predicated region
    $region6: #{tpu_custom_call.1} parent=1 // pred_check
      _
    $region7: #{tpu_custom_call.1} parent=1 // pred_check_branch
      %33 = sbr.rel (0) target = $region9
    $region8: #{tpu_custom_call.1} parent=1 // pred_region
      %s35 = ssub.s32 128, 128
      %36 = vsyncadd [#allocation7], %s35
      %s38 = sshll.u32 [#allocation6], 4
      %s39 = int_to_ptr.vmem [resolvable:$true] %s38
      %41 = dma.hbm_to_vmem [thread:$0]  %s1, 128, %s39, [#allocation7]
    $region9: #{tpu_custom_call.1} parent=1 // pred_fallthru
      _
    // Predicated region
    $region10: #{tpu_custom_call.1} parent=1 // pred_check
      _
    $region11: #{tpu_custom_call.1} parent=1 // pred_check_branch
      %43 = sbr.rel (0) target = $region13
    $region12: #{tpu_custom_call.1} parent=1 // pred_region
      %s45 = ssub.s32 384, 384
      %46 = vsyncadd [#allocation7], %s45
      %s48 = sshll.u32 [#allocation8], 4
      %s49 = int_to_ptr.vmem [resolvable:$true] %s48
      %51 = dma.hbm_to_vmem [thread:$0]  %s2, 384, %s49, [#allocation7]
    $region13: #{tpu_custom_call.1} parent=1 // pred_fallthru
      _
    // Predicated region
    $region14: #{tpu_custom_call.1} parent=1 // pred_check
      _
    $region15: #{tpu_custom_call.1} parent=1 // pred_check_branch
      %53 = sbr.rel (0) target = $region17
    $region16: #{tpu_custom_call.1} parent=1 // pred_region
      %s55 = ssub.s32 6144, 6144
      %56 = vsyncadd [#allocation10], %s55
      %s57 = sshll.u32 [#allocation9], 4
      %s58 = int_to_ptr.vmem [resolvable:$true] %s57
      %63 = dma.hbm_to_vmem [thread:$0]  %s3, 6144, %s58, [#allocation10], 384, 384, 24
    $region17: #{tpu_custom_call.1} parent=1 // pred_fallthru
      _
    // Predicated region
    $region18: #{tpu_custom_call.1} parent=1 // pred_check
      _
    $region19: #{tpu_custom_call.1} parent=1 // pred_check_branch
      %65 = sbr.rel (0) target = $region21
    $region20: #{tpu_custom_call.1} parent=1 // pred_region
      %s67 = ssub.s32 48, 48
      %68 = vsyncadd [#allocation10], %s67
      %s70 = sshll.u32 [#allocation11], 4
      %s71 = int_to_ptr.vmem [resolvable:$true] %s70
      %73 = dma.hbm_to_vmem [thread:$0]  %s4, 48, %s71, [#allocation10]
    $region21: #{tpu_custom_call.1} parent=1 // pred_fallthru
      _
    // Predicated region
    $region22: #{tpu_custom_call.1} parent=1 // pred_check
      _
    $region23: #{tpu_custom_call.1} parent=1 // pred_check_branch
      %75 = sbr.rel (0) target = $region25
    $region24: #{tpu_custom_call.1} parent=1 // pred_region
      %s77 = ssub.s32 48, 48
      %78 = vsyncadd [#allocation13], %s77
      %s80 = sshll.u32 [#allocation12], 4
      %s81 = int_to_ptr.vmem [resolvable:$true] %s80
      %83 = dma.hbm_to_vmem [thread:$0]  %s5, 48, %s81, [#allocation13]
    $region25: #{tpu_custom_call.1} parent=1 // pred_fallthru
      _
    // Predicated region
    $region26: #{tpu_custom_call.1} parent=1 // pred_check
      _
    $region27: #{tpu_custom_call.1} parent=1 // pred_check_branch
      %85 = sbr.rel (0) target = $region29
    $region28: #{tpu_custom_call.1} parent=1 // pred_region
      %s87 = ssub.s32 16, 16
      %88 = vsyncadd [#allocation13], %s87
      %s90 = sshll.u32 [#allocation14], 4
      %s91 = int_to_ptr.vmem [resolvable:$true] %s90
      %93 = dma.hbm_to_vmem [thread:$0]  %s6, 16, %s91, [#allocation13]
    $region29: #{tpu_custom_call.1} parent=1 // pred_fallthru
      _
    // Predicated region
    $region30: #{tpu_custom_call.1} parent=1 // pred_check
      _
    $region31: #{tpu_custom_call.1} parent=1 // pred_check_branch
      %95 = sbr.rel (0) target = $region33
    $region32: #{tpu_custom_call.1} parent=1 // pred_region
      _
    $region33: #{tpu_custom_call.1} parent=1 // pred_fallthru
      _
    // Predicated region
    $region34: #{tpu_custom_call.1} parent=1 // pred_check
      _
    $region35: #{tpu_custom_call.1} parent=1 // pred_check_branch
      %97 = sbr.rel (0) target = $region37
    $region36: #{tpu_custom_call.1} parent=1 // pred_region
      %98 = dma.done [#allocation4], 128
    $region37: #{tpu_custom_call.1} parent=1 // pred_fallthru
      _
    // Predicated region
    $region38: #{tpu_custom_call.1} parent=1 // pred_check
      _
    $region39: #{tpu_custom_call.1} parent=1 // pred_check_branch
      %100 = sbr.rel (0) target = $region41
    $region40: #{tpu_custom_call.1} parent=1 // pred_region
      %101 = dma.done [#allocation7], 128
    $region41: #{tpu_custom_call.1} parent=1 // pred_fallthru
      _
    // Predicated region
    $region42: #{tpu_custom_call.1} parent=1 // pred_check
      _
    $region43: #{tpu_custom_call.1} parent=1 // pred_check_branch
      %103 = sbr.rel (0) target = $region45
    $region44: #{tpu_custom_call.1} parent=1 // pred_region
      %104 = dma.done [#allocation7], 384
    $region45: #{tpu_custom_call.1} parent=1 // pred_fallthru
      _
    // Predicated region
    $region46: #{tpu_custom_call.1} parent=1 // pred_check
      _
    $region47: #{tpu_custom_call.1} parent=1 // pred_check_branch
      %106 = sbr.rel (0) target = $region49
    $region48: #{tpu_custom_call.1} parent=1 // pred_region
      %107 = dma.done [#allocation10], 6144
    $region49: #{tpu_custom_call.1} parent=1 // pred_fallthru
      _
    // Predicated region
    $region50: #{tpu_custom_call.1} parent=1 // pred_check
      _
    $region51: #{tpu_custom_call.1} parent=1 // pred_check_branch
      %109 = sbr.rel (0) target = $region53
    $region52: #{tpu_custom_call.1} parent=1 // pred_region
      %110 = dma.done [#allocation10], 48
    $region53: #{tpu_custom_call.1} parent=1 // pred_fallthru
      _
    // Predicated region
    $region54: #{tpu_custom_call.1} parent=1 // pred_check
      _
    $region55: #{tpu_custom_call.1} parent=1 // pred_check_branch
      %112 = sbr.rel (0) target = $region57
    $region56: #{tpu_custom_call.1} parent=1 // pred_region
      %113 = dma.done [#allocation13], 48
    $region57: #{tpu_custom_call.1} parent=1 // pred_fallthru
      _
    // Predicated region
    $region58: #{tpu_custom_call.1} parent=1 // pred_check
      _
    $region59: #{tpu_custom_call.1} parent=1 // pred_check_branch
      %115 = sbr.rel (0) target = $region61
    $region60: #{tpu_custom_call.1} parent=1 // pred_region
      %116 = dma.done [#allocation13], 16
    $region61: #{tpu_custom_call.1} parent=1 // pred_fallthru
      _
    %v117 = vld [vmem:[#allocation3] sm:$0xff]
    %v118 = vld [vmem:[#allocation6] sm:$0xff]
    %v119 = vld [vmem:[#allocation8] sm:$0xff]
    %v120 = vld [vmem:[#allocation8 + $0x8] sm:$0xff]
    %v121 = vld [vmem:[#allocation8 + $0x10] sm:$0xff]
    %v122 = vld [vmem:[#allocation9] sm:$0xff]
    %v123 = vld [vmem:[#allocation9 + $0x8] sm:$0xff]
    %v124 = vld [vmem:[#allocation9 + $0x10] sm:$0xff]
    %v125 = vld [vmem:[#allocation9 + $0x18] sm:$0xff]
    %v126 = vld [vmem:[#allocation9 + $0x20] sm:$0xff]
    %v127 = vld [vmem:[#allocation9 + $0x28] sm:$0xff]
    %v128 = vld [vmem:[#allocation9 + $0x30] sm:$0xff]
    %v129 = vld [vmem:[#allocation9 + $0x38] sm:$0xff]
    %v130 = vld [vmem:[#allocation9 + $0x40] sm:$0xff]
    %v131 = vld [vmem:[#allocation9 + $0x48] sm:$0xff]
    %v132 = vld [vmem:[#allocation9 + $0x50] sm:$0xff]
    %v133 = vld [vmem:[#allocation9 + $0x58] sm:$0xff]
    %v134 = vld [vmem:[#allocation9 + $0x60] sm:$0xff]
    %v135 = vld [vmem:[#allocation9 + $0x68] sm:$0xff]
    %v136 = vld [vmem:[#allocation9 + $0x70] sm:$0xff]
    %v137 = vld [vmem:[#allocation9 + $0x78] sm:$0xff]
    %v138 = vld [vmem:[#allocation9 + $0x80] sm:$0xff]
    %v139 = vld [vmem:[#allocation9 + $0x88] sm:$0xff]
    %v140 = vld [vmem:[#allocation9 + $0x90] sm:$0xff]
    %v141 = vld [vmem:[#allocation9 + $0x98] sm:$0xff]
    %v142 = vld [vmem:[#allocation9 + $0xa0] sm:$0xff]
    %v143 = vld [vmem:[#allocation9 + $0xa8] sm:$0xff]
    %v144 = vld [vmem:[#allocation9 + $0xb0] sm:$0xff]
    %v145 = vld [vmem:[#allocation9 + $0xb8] sm:$0xff]
    %v146 = vld [vmem:[#allocation9 + $0xc0] sm:$0xff]
    %v147 = vld [vmem:[#allocation9 + $0xc8] sm:$0xff]
    %v148 = vld [vmem:[#allocation9 + $0xd0] sm:$0xff]
    %v149 = vld [vmem:[#allocation9 + $0xd8] sm:$0xff]
    %v150 = vld [vmem:[#allocation9 + $0xe0] sm:$0xff]
    %v151 = vld [vmem:[#allocation9 + $0xe8] sm:$0xff]
    %v152 = vld [vmem:[#allocation9 + $0xf0] sm:$0xff]
    %v153 = vld [vmem:[#allocation9 + $0xf8] sm:$0xff]
    %v154 = vld [vmem:[#allocation9 + $0x100] sm:$0xff]
    %v155 = vld [vmem:[#allocation9 + $0x108] sm:$0xff]
    %v156 = vld [vmem:[#allocation9 + $0x110] sm:$0xff]
    %v157 = vld [vmem:[#allocation9 + $0x118] sm:$0xff]
    %v158 = vld [vmem:[#allocation9 + $0x120] sm:$0xff]
    %v159 = vld [vmem:[#allocation9 + $0x128] sm:$0xff]
    %v160 = vld [vmem:[#allocation9 + $0x130] sm:$0xff]
    %v161 = vld [vmem:[#allocation9 + $0x138] sm:$0xff]
    %v162 = vld [vmem:[#allocation9 + $0x140] sm:$0xff]
    %v163 = vld [vmem:[#allocation9 + $0x148] sm:$0xff]
    %v164 = vld [vmem:[#allocation9 + $0x150] sm:$0xff]
    %v165 = vld [vmem:[#allocation9 + $0x158] sm:$0xff]
    %v166 = vld [vmem:[#allocation9 + $0x160] sm:$0xff]
    %v167 = vld [vmem:[#allocation9 + $0x168] sm:$0xff]
    %v168 = vld [vmem:[#allocation9 + $0x170] sm:$0xff]
    %v169 = vld [vmem:[#allocation9 + $0x178] sm:$0xff]
    %v170 = vld [vmem:[#allocation11] sm:$0x7]
    %v171 = vld [vmem:[#allocation12] sm:$0x7]
    %v173 = vlaneseq
    %v174 = vshrl.u32 %v173, 7
    %v175 = vsub.s32 0, %v174
    %v176 = vrot.slane %v170, %v175
    %v177 = vlaneseq
    %v178 = vshrl.u32 %v177, 7
    %v179 = vsub.s32 1, %v178
    %v180 = vrot.slane %v170, %v179
    %v181 = vlaneseq
    %v182 = vshrl.u32 %v181, 7
    %v183 = vsub.s32 2, %v182
    %v184 = vrot.slane %v170, %v183
    %vm188 = vcmask 64512
    %v190 = vsel %vm188, %v117, 0
    %192 = vmatprep.subr.mxu0 %v120
    %193 = vmatpush1.msra.mxu0 %v119
    %194 = vmatprep.subr.mxu0 0.0
    %195 = vmatpush1.msra.mxu0 0.0
    %196 = vmatprep.subr.mxu0 0.0
    %197 = vmatpush1.msra.mxu0 0.0
    %198 = vmatprep.subr.mxu0 0.0
    %199 = vmatpush1.msra.mxu0 0.0
    %200 = vmatprep.subr.mxu0 0.0
    %201 = vmatpush1.msra.mxu0 0.0
    %202 = vmatprep.subr.mxu0 0.0
    %203 = vmatpush1.msra.mxu0 0.0
    %204 = vmatprep.subr.mxu0 0.0
    %205 = vmatpush1.msra.mxu0 0.0
    %206 = vmatprep.subr.mxu0 0.0
    %207 = vmatpush1.msra.mxu0 0.0
    %208 = vmatprep.subr.mxu0 0.0
    %209 = vmatpush1.msra.mxu0 0.0
    %210 = vmatprep.subr.mxu0 0.0
    %211 = vmatpush1.msra.mxu0 0.0
    %212 = vmatprep.subr.mxu0 0.0
    %213 = vmatpush1.msra.mxu0 0.0
    %214 = vmatprep.subr.mxu0 0.0
    %215 = vmatpush1.msra.mxu0 0.0
    %216 = vmatprep.subr.mxu0 0.0
    %217 = vmatpush1.msra.mxu0 0.0
    %218 = vmatprep.subr.mxu0 0.0
    %219 = vmatpush1.msra.mxu0 0.0
    %220 = vmatprep.subr.mxu0 0.0
    %221 = vmatpush1.msra.mxu0 0.0
    %222 = vmatprep.subr.mxu0 0.0
    %223 = vmatpush1.msra.mxu0 0.0
    %224 = vmatprep.subr.mxu0 0.0
    %225 = vmatpush1.msra.mxu0 0.0
    %226 = vmatprep.subr.mxu0 0.0
    %227 = vmatpush1.msra.mxu0 0.0
    %228 = vmatprep.subr.mxu0 0.0
    %229 = vmatpush1.msra.mxu0 0.0
    %230 = vmatprep.subr.mxu0 0.0
    %231 = vmatpush1.msra.mxu0 0.0
    %232 = vmatprep.subr.mxu0 0.0
    %233 = vmatpush1.msra.mxu0 0.0
    %234 = vmatprep.subr.mxu0 0.0
    %235 = vmatpush1.msra.mxu0 0.0
    %236 = vmatprep.subr.mxu0 0.0
    %237 = vmatpush1.msra.mxu0 0.0
    %238 = vmatprep.subr.mxu0 0.0
    %239 = vmatpush1.msra.mxu0 0.0
    %240 = vmatprep.subr.mxu0 0.0
    %241 = vmatpush1.msra.mxu0 0.0
    %242 = vmatprep.subr.mxu0 0.0
    %243 = vmatpush1.msra.mxu0 0.0
    %244 = vmatprep.subr.mxu0 0.0
    %245 = vmatpush1.msra.mxu0 0.0
    %246 = vmatprep.subr.mxu0 0.0
    %247 = vmatpush1.msra.mxu0 0.0
    %248 = vmatprep.subr.mxu0 0.0
    %249 = vmatpush1.msra.mxu0 0.0
    %250 = vmatprep.subr.mxu0 0.0
    %251 = vmatpush1.msra.mxu0 0.0
    %252 = vmatprep.subr.mxu0 0.0
    %253 = vmatpush1.msra.mxu0 0.0
    %254 = vmatprep.subr.mxu0 0.0
    %255 = vmatpush1.msra.mxu0 0.0
    %256 = vmatprep.mubr.f32.mxu0 0.0
    %257 = vmatmul.mubr.f32.gmra.mrb[0].mxu0 %v190
    %v258 = vpop.f32.mrb[0].mxu0
    %v259 = vadd.f32 %v176, %v258
    %v260 = vpop.f32.mrb[0].mxu0
    %v261 = vadd.f32 %v180, %v260
    %262 = vdwg.mxu0
    %263 = vmatprep.subr.mxu0 0.0
    %264 = vmatpush1.msra.mxu0 %v121
    %265 = vmatprep.subr.mxu0 0.0
    %266 = vmatpush1.msra.mxu0 0.0
    %267 = vmatprep.subr.mxu0 0.0
    %268 = vmatpush1.msra.mxu0 0.0
    %269 = vmatprep.subr.mxu0 0.0
    %270 = vmatpush1.msra.mxu0 0.0
    %271 = vmatprep.subr.mxu0 0.0
    %272 = vmatpush1.msra.mxu0 0.0
    %273 = vmatprep.subr.mxu0 0.0
    %274 = vmatpush1.msra.mxu0 0.0
    %275 = vmatprep.subr.mxu0 0.0
    %276 = vmatpush1.msra.mxu0 0.0
    %277 = vmatprep.subr.mxu0 0.0
    %278 = vmatpush1.msra.mxu0 0.0
    %279 = vmatprep.subr.mxu0 0.0
    %280 = vmatpush1.msra.mxu0 0.0
    %281 = vmatprep.subr.mxu0 0.0
    %282 = vmatpush1.msra.mxu0 0.0
    %283 = vmatprep.subr.mxu0 0.0
    %284 = vmatpush1.msra.mxu0 0.0
    %285 = vmatprep.subr.mxu0 0.0
    %286 = vmatpush1.msra.mxu0 0.0
    %287 = vmatprep.subr.mxu0 0.0
    %288 = vmatpush1.msra.mxu0 0.0
    %289 = vmatprep.subr.mxu0 0.0
    %290 = vmatpush1.msra.mxu0 0.0
    %291 = vmatprep.subr.mxu0 0.0
    %292 = vmatpush1.msra.mxu0 0.0
    %293 = vmatprep.subr.mxu0 0.0
    %294 = vmatpush1.msra.mxu0 0.0
    %295 = vmatprep.subr.mxu0 0.0
    %296 = vmatpush1.msra.mxu0 0.0
    %297 = vmatprep.subr.mxu0 0.0
    %298 = vmatpush1.msra.mxu0 0.0
    %299 = vmatprep.subr.mxu0 0.0
    %300 = vmatpush1.msra.mxu0 0.0
    %301 = vmatprep.subr.mxu0 0.0
    %302 = vmatpush1.msra.mxu0 0.0
    %303 = vmatprep.subr.mxu0 0.0
    %304 = vmatpush1.msra.mxu0 0.0
    %305 = vmatprep.subr.mxu0 0.0
    %306 = vmatpush1.msra.mxu0 0.0
    %307 = vmatprep.subr.mxu0 0.0
    %308 = vmatpush1.msra.mxu0 0.0
    %309 = vmatprep.subr.mxu0 0.0
    %310 = vmatpush1.msra.mxu0 0.0
    %311 = vmatprep.subr.mxu0 0.0
    %312 = vmatpush1.msra.mxu0 0.0
    %313 = vmatprep.subr.mxu0 0.0
    %314 = vmatpush1.msra.mxu0 0.0
    %315 = vmatprep.subr.mxu0 0.0
    %316 = vmatpush1.msra.mxu0 0.0
    %317 = vmatprep.subr.mxu0 0.0
    %318 = vmatpush1.msra.mxu0 0.0
    %319 = vmatprep.subr.mxu0 0.0
    %320 = vmatpush1.msra.mxu0 0.0
    %321 = vmatprep.subr.mxu0 0.0
    %322 = vmatpush1.msra.mxu0 0.0
    %323 = vmatprep.subr.mxu0 0.0
    %324 = vmatpush1.msra.mxu0 0.0
    %325 = vmatprep.subr.mxu0 0.0
    %326 = vmatpush1.msra.mxu0 0.0
    %327 = vmatprep.mubr.f32.mxu0 0.0
    %328 = vmatmul.mubr.f32.gmra.mrb[0].mxu0 %v190
    %v329 = vpop.f32.mrb[0].mxu0
    %v330 = vadd.f32 %v184, %v329
    %v331 = vpop.f32.mrb[0].mxu0
    %332 = vdwg.mxu0
    %v334 = vlaneseq
    %v335 = vshrl.u32 %v334, 7
    %v336 = vsub.s32 0, %v335
    %v337 = vrot.slane %v171, %v336
    %v338 = vlaneseq
    %v339 = vshrl.u32 %v338, 7
    %v340 = vsub.s32 1, %v339
    %v341 = vrot.slane %v171, %v340
    %v342 = vlaneseq
    %v343 = vshrl.u32 %v342, 7
    %v344 = vsub.s32 2, %v343
    %v345 = vrot.slane %v171, %v344
    %349 = vmatprep.subr.mxu0 %v123
    %350 = vmatpush1.msra.mxu0 %v122
    %351 = vmatprep.subr.mxu0 %v126
    %352 = vmatpush1.msra.mxu0 %v125
    %353 = vmatprep.subr.mxu0 %v129
    %354 = vmatpush1.msra.mxu0 %v128
    %355 = vmatprep.subr.mxu0 %v132
    %356 = vmatpush1.msra.mxu0 %v131
    %357 = vmatprep.subr.mxu0 %v135
    %358 = vmatpush1.msra.mxu0 %v134
    %359 = vmatprep.subr.mxu0 %v138
    %360 = vmatpush1.msra.mxu0 %v137
    %361 = vmatprep.subr.mxu0 %v141
    %362 = vmatpush1.msra.mxu0 %v140
    %363 = vmatprep.subr.mxu0 %v144
    %364 = vmatpush1.msra.mxu0 %v143
    %365 = vmatprep.subr.mxu0 %v147
    %366 = vmatpush1.msra.mxu0 %v146
    %367 = vmatprep.subr.mxu0 %v150
    %368 = vmatpush1.msra.mxu0 %v149
    %369 = vmatprep.subr.mxu0 %v153
    %370 = vmatpush1.msra.mxu0 %v152
    %371 = vmatprep.subr.mxu0 %v156
    %372 = vmatpush1.msra.mxu0 %v155
    %373 = vmatprep.subr.mxu0 %v159
    %374 = vmatpush1.msra.mxu0 %v158
    %375 = vmatprep.subr.mxu0 %v162
    %376 = vmatpush1.msra.mxu0 %v161
    %377 = vmatprep.subr.mxu0 %v165
    %378 = vmatpush1.msra.mxu0 %v164
    %379 = vmatprep.subr.mxu0 %v168
    %380 = vmatpush1.msra.mxu0 %v167
    %381 = vmatprep.subr.mxu0 0.0
    %382 = vmatpush1.msra.mxu0 0.0
    %383 = vmatprep.subr.mxu0 0.0
    %384 = vmatpush1.msra.mxu0 0.0
    %385 = vmatprep.subr.mxu0 0.0
    %386 = vmatpush1.msra.mxu0 0.0
    %387 = vmatprep.subr.mxu0 0.0
    %388 = vmatpush1.msra.mxu0 0.0
    %389 = vmatprep.subr.mxu0 0.0
    %390 = vmatpush1.msra.mxu0 0.0
    %391 = vmatprep.subr.mxu0 0.0
    %392 = vmatpush1.msra.mxu0 0.0
    %393 = vmatprep.subr.mxu0 0.0
    %394 = vmatpush1.msra.mxu0 0.0
    %395 = vmatprep.subr.mxu0 0.0
    %396 = vmatpush1.msra.mxu0 0.0
    %397 = vmatprep.subr.mxu0 0.0
    %398 = vmatpush1.msra.mxu0 0.0
    %399 = vmatprep.subr.mxu0 0.0
    %400 = vmatpush1.msra.mxu0 0.0
    %401 = vmatprep.subr.mxu0 0.0
    %402 = vmatpush1.msra.mxu0 0.0
    %403 = vmatprep.subr.mxu0 0.0
    %404 = vmatpush1.msra.mxu0 0.0
    %405 = vmatprep.subr.mxu0 0.0
    %406 = vmatpush1.msra.mxu0 0.0
    %407 = vmatprep.subr.mxu0 0.0
    %408 = vmatpush1.msra.mxu0 0.0
    %409 = vmatprep.subr.mxu0 0.0
    %410 = vmatpush1.msra.mxu0 0.0
    %411 = vmatprep.subr.mxu0 0.0
    %412 = vmatpush1.msra.mxu0 0.0
    %413 = vmatprep.mubr.f32.mxu0 0.0
    %414 = vmatmul.mubr.f32.gmra.mrb[0].mxu0 %v118
    %v415 = vpop.f32.mrb[0].mxu0
    %v416 = vadd.f32 %v337, %v415
    %v417 = vpop.f32.mrb[0].mxu0
    %v418 = vadd.f32 %v341, %v417
    %419 = vdwg.mxu0
    %420 = vmatprep.subr.mxu0 0.0
    %421 = vmatpush1.msra.mxu0 %v124
    %422 = vmatprep.subr.mxu0 0.0
    %423 = vmatpush1.msra.mxu0 %v127
    %424 = vmatprep.subr.mxu0 0.0
    %425 = vmatpush1.msra.mxu0 %v130
    %426 = vmatprep.subr.mxu0 0.0
    %427 = vmatpush1.msra.mxu0 %v133
    %428 = vmatprep.subr.mxu0 0.0
    %429 = vmatpush1.msra.mxu0 %v136
    %430 = vmatprep.subr.mxu0 0.0
    %431 = vmatpush1.msra.mxu0 %v139
    %432 = vmatprep.subr.mxu0 0.0
    %433 = vmatpush1.msra.mxu0 %v142
    %434 = vmatprep.subr.mxu0 0.0
    %435 = vmatpush1.msra.mxu0 %v145
    %436 = vmatprep.subr.mxu0 0.0
    %437 = vmatpush1.msra.mxu0 %v148
    %438 = vmatprep.subr.mxu0 0.0
    %439 = vmatpush1.msra.mxu0 %v151
    %440 = vmatprep.subr.mxu0 0.0
    %441 = vmatpush1.msra.mxu0 %v154
    %442 = vmatprep.subr.mxu0 0.0
    %443 = vmatpush1.msra.mxu0 %v157
    %444 = vmatprep.subr.mxu0 0.0
    %445 = vmatpush1.msra.mxu0 %v160
    %446 = vmatprep.subr.mxu0 0.0
    %447 = vmatpush1.msra.mxu0 %v163
    %448 = vmatprep.subr.mxu0 0.0
    %449 = vmatpush1.msra.mxu0 %v166
    %450 = vmatprep.subr.mxu0 0.0
    %451 = vmatpush1.msra.mxu0 %v169
    %452 = vmatprep.subr.mxu0 0.0
    %453 = vmatpush1.msra.mxu0 0.0
    %454 = vmatprep.subr.mxu0 0.0
    %455 = vmatpush1.msra.mxu0 0.0
    %456 = vmatprep.subr.mxu0 0.0
    %457 = vmatpush1.msra.mxu0 0.0
    %458 = vmatprep.subr.mxu0 0.0
    %459 = vmatpush1.msra.mxu0 0.0
    %460 = vmatprep.subr.mxu0 0.0
    %461 = vmatpush1.msra.mxu0 0.0
    %462 = vmatprep.subr.mxu0 0.0
    %463 = vmatpush1.msra.mxu0 0.0
    %464 = vmatprep.subr.mxu0 0.0
    %465 = vmatpush1.msra.mxu0 0.0
    %466 = vmatprep.subr.mxu0 0.0
    %467 = vmatpush1.msra.mxu0 0.0
    %468 = vmatprep.subr.mxu0 0.0
    %469 = vmatpush1.msra.mxu0 0.0
    %470 = vmatprep.subr.mxu0 0.0
    %471 = vmatpush1.msra.mxu0 0.0
    %472 = vmatprep.subr.mxu0 0.0
    %473 = vmatpush1.msra.mxu0 0.0
    %474 = vmatprep.subr.mxu0 0.0
    %475 = vmatpush1.msra.mxu0 0.0
    %476 = vmatprep.subr.mxu0 0.0
    %477 = vmatpush1.msra.mxu0 0.0
    %478 = vmatprep.subr.mxu0 0.0
    %479 = vmatpush1.msra.mxu0 0.0
    %480 = vmatprep.subr.mxu0 0.0
    %481 = vmatpush1.msra.mxu0 0.0
    %482 = vmatprep.subr.mxu0 0.0
    %483 = vmatpush1.msra.mxu0 0.0
    %484 = vmatprep.mubr.f32.mxu0 0.0
    %485 = vmatmul.mubr.f32.gmra.mrb[0].mxu0 %v118
    %v486 = vpop.f32.mrb[0].mxu0
    %v487 = vadd.f32 %v345, %v486
    %v488 = vpop.f32.mrb[0].mxu0
    %489 = vdwg.mxu0
    %v490 = vadd.f32 %v259, %v416
    %v491 = vxor.u32 %v490, 2147483648
    %v492 = vmul.f32 %v491, 1.442695
    %v493 = vpow.pop %v492
    %v494 = vadd.f32 %v493, 1.0
    %v495 = vrcp.pop %v494
    %v496 = vmul.f32 1.0, %v495
    %v497 = vadd.f32 %v261, %v418
    %v498 = vxor.u32 %v497, 2147483648
    %v499 = vmul.f32 %v498, 1.442695
    %v500 = vpow.pop %v499
    %v501 = vadd.f32 %v500, 1.0
    %v502 = vrcp.pop %v501
    %v503 = vmul.f32 1.0, %v502
    %v504 = vmul.f32 %v496, %v487
    %v505 = vadd.f32 %v330, %v504
    %v506 = vtanh.pop %v505
    %v507 = vsub.f32 1.0, %v503
    %v508 = vmul.f32 %v507, %v506
    %v509 = vmul.f32 %v503, %v118
    %v510 = vadd.f32 %v508, %v509
    %v511 = vld [vmem:[#allocation14] sm:$0x1]
    %v513 = vlaneseq
    %v514 = vshrl.u32 %v513, 7
    %v515 = vsub.s32 0, %v514
    %v516 = vrot.slane %v511, %v515
    %v518 = vmul.f32 %v510, %v516
    %519 = vadd.xlane.f32.xlu0 %v518
    %v520 = vpop.xlane.xlu0 %519
    %s521 = sld [smem:[#allocation2]]
    %v522 = vstv %s521
    %v523 = vadd.f32 %v520, %v522
    %524 = vst [vmem:[#allocation15] sm:$0xff] %v523
    %525 = vst [vmem:[#allocation16] sm:$0xff] %v510
    // Predicated region
    $region62: #{tpu_custom_call.1} parent=1 // pred_check
      _
    $region63: #{tpu_custom_call.1} parent=1 // pred_check_branch
      %527 = sbr.rel (0) target = $region65
    $region64: #{tpu_custom_call.1} parent=1 // pred_region
      %s529 = ssub.s32 128, 128
      %530 = vsyncadd [#allocation5], %s529
      %s532 = sshll.u32 [#allocation15], 4
      %s533 = int_to_ptr.vmem [resolvable:$true] %s532
      %535 = dma.vmem_to_hbm [thread:$0]  %s533, 128, %s8, [#allocation5]
    $region65: #{tpu_custom_call.1} parent=1 // pred_fallthru
      _
    // Predicated region
    $region66: #{tpu_custom_call.1} parent=1 // pred_check
      _
    $region67: #{tpu_custom_call.1} parent=1 // pred_check_branch
      %537 = sbr.rel (0) target = $region69
    $region68: #{tpu_custom_call.1} parent=1 // pred_region
      %s539 = ssub.s32 128, 128
      %540 = vsyncadd [#allocation17], %s539
      %s542 = sshll.u32 [#allocation16], 4
      %s543 = int_to_ptr.vmem [resolvable:$true] %s542
      %545 = dma.vmem_to_hbm [thread:$0]  %s543, 128, %s9, [#allocation17]
    $region69: #{tpu_custom_call.1} parent=1 // pred_fallthru
      _
    // Predicated region
    $region70: #{tpu_custom_call.1} parent=1 // pred_check
      _
    $region71: #{tpu_custom_call.1} parent=1 // pred_check_branch
      %547 = sbr.rel (0) target = $region73
    $region72: #{tpu_custom_call.1} parent=1 // pred_region
      %548 = dma.done [#allocation5], 128
    $region73: #{tpu_custom_call.1} parent=1 // pred_fallthru
      _
    // Predicated region
    $region74: #{tpu_custom_call.1} parent=1 // pred_check
      _
    $region75: #{tpu_custom_call.1} parent=1 // pred_check_branch
      %550 = sbr.rel (0) target = $region77
    $region76: #{tpu_custom_call.1} parent=1 // pred_region
      %551 = dma.done [#allocation17], 128
    $region77: #{tpu_custom_call.1} parent=1 // pred_fallthru
      _
    %552 = vsyncpa [#allocation4], 1
    %553 = vsyncpa [#allocation7], 1
    %554 = vsyncpa [#allocation10], 1
    %555 = vsyncpa [#allocation13], 1
    %556 = vsyncpa [#allocation5], 1
    %557 = vsyncpa [#allocation17], 1

</llo_original>
